<compile_context>
chip_gen: v7x
topology: tpu7x:2x2x1
jax: 0.10.0
libtpu: 0.0.40
codegen_flags: <defaults>
</compile_context>

<pallas_src>
import functools

import jax
import jax.numpy as jnp
from jax.experimental import pallas as pl
from jax.experimental.pallas import tpu as pltpu


def _edge_weighted_partials_kernel(pred_ref, tgt_ref, out_ref, *, tb, n_images, needs_mask):
    """Partial reductions for the edge-weighted MSE loss over a (tb, H, W) image block.

    out_ref block: (1, 8, 128) float32, packed as
      sublane 0: sum(diff^2)            (broadcast across lanes)
      sublane 1: sum(grad_mag * diff^2)
      sublane 2+: max(grad_mag) over the valid images of this block
    """
    pred = pred_ref[...].astype(jnp.float32)   # (tb, H, W)
    tgt = tgt_ref[...].astype(jnp.float32)     # (tb, H, W)
    _, H, W = tgt.shape

    # Border masks, built once per block and reused by every shifted() call.
    rows = jax.lax.broadcasted_iota(jnp.int32, tgt.shape, 1)
    cols = jax.lax.broadcasted_iota(jnp.int32, tgt.shape, 2)
    m_col_m1 = cols >= 1          # y[..., j] = x[..., j-1] is in-bounds
    m_col_p1 = cols < (W - 1)     # y[..., j] = x[..., j+1] is in-bounds
    m_row_m1 = rows >= 1          # y[..., i, :] = x[..., i-1, :] is in-bounds
    m_row_p1 = rows < (H - 1)     # y[..., i, :] = x[..., i+1, :] is in-bounds

    def shift_cols(x, dc, mask):
        # y[b, i, j] = x[b, i, j + dc], zero outside (== conv2d zero padding).
        # pltpu.roll needs a non-negative static shift -> rotate by (-dc) mod W and mask.
        return jnp.where(mask, pltpu.roll(x, shift=(-dc) % W, axis=2), 0.0)

    def shift_rows(x, dr, mask):
        return jnp.where(mask, pltpu.roll(x, shift=(-dr) % H, axis=1), 0.0)

    # Separable Sobel (PyTorch conv2d = cross-correlation):
    #   sobel_x = [1,2,1]^T (rows) x [1,0,-1] (cols)
    #   sobel_y = [1,0,-1]^T (rows) x [1,2,1]  (cols)
    left = shift_cols(tgt, -1, m_col_m1)     # t[i, j-1]
    right = shift_cols(tgt, 1, m_col_p1)     # t[i, j+1]
    hd = left - right                        # horizontal difference
    hs = left + 2.0 * tgt + right            # horizontal smoothing
    grad_x = shift_rows(hd, -1, m_row_m1) + 2.0 * hd + shift_rows(hd, 1, m_row_p1)
    grad_y = shift_rows(hs, -1, m_row_m1) - shift_rows(hs, 1, m_row_p1)
    grad_mag = jnp.sqrt(grad_x * grad_x + grad_y * grad_y + 1e-6)

    diff = pred - tgt
    d2 = diff * diff

    sum_d2 = jnp.sum(d2)
    sum_gd2 = jnp.sum(grad_mag * d2)

    if needs_mask:
        # Zero-padded images in the ragged last block contribute 0 to the sums
        # (pred == target == 0 there) but must be excluded from the max.
        img_idx = (pl.program_id(0) * tb
                   + jax.lax.broadcasted_iota(jnp.int32, grad_mag.shape, 0))
        gmax = jnp.max(jnp.where(img_idx < n_images, grad_mag, 0.0))
    else:
        gmax = jnp.max(grad_mag)

    # Pack all three partials into one lane-dense (8, 128) tile -> single unmasked store.
    row_id = jax.lax.broadcasted_iota(jnp.int32, out_ref.shape[1:], 0)
    out_ref[0] = jnp.where(row_id == 0, sum_d2,
                           jnp.where(row_id == 1, sum_gd2, gmax))


def weighted_mse_loss(pred, target, *, target_block_bytes=2 * 1024 * 1024):
    """pred, target: (N, 1, H, W) float32/bfloat16 (NCHW, single channel)."""
    assert pred.shape == target.shape
    n, c, h, w = pred.shape
    assert c == 1, "Sobel conv in the reference module is single-channel."

    pred3 = pred.reshape(n, h, w)
    tgt3 = target.reshape(n, h, w)

    # --- choose how many images go into each grid step ------------------------------
    itemsize = max(jnp.dtype(pred3.dtype).itemsize, jnp.dtype(tgt3.dtype).itemsize)
    img_bytes = max(h * w * itemsize, 1)
    tb = max(1, target_block_bytes // img_bytes)
    if n >= 2:
        tb = min(tb, pl.cdiv(n, 2))   # keep >= 2 grid steps so both v7x TCs get work
    tb = min(tb, n)
    grid_n = pl.cdiv(n, tb)
    n_pad = grid_n * tb
    needs_mask = n_pad != n
    if needs_mask:
        pad = n_pad - n
        pred3 = jnp.concatenate([pred3, jnp.zeros((pad, h, w), pred3.dtype)], axis=0)
        tgt3 = jnp.concatenate([tgt3, jnp.zeros((pad, h, w), tgt3.dtype)], axis=0)

    # --- VMEM budget: double-buffered inputs + ~12 full-size f32 temporaries --------
    in_block_bytes = tb * h * w * (jnp.dtype(pred3.dtype).itemsize
                                   + jnp.dtype(tgt3.dtype).itemsize)
    est = 2 * in_block_bytes + 12 * tb * h * w * 4 + 4 * 8 * 128 * 4 + (1 << 20)
    vmem_limit = int(min(48 * 1024 * 1024, max(16 * 1024 * 1024, est)))

    img_spec = pl.BlockSpec((tb, h, w), lambda i: (i, 0, 0))
    part_spec = pl.BlockSpec((1, 8, 128), lambda i: (i, 0, 0))

    kernel = functools.partial(_edge_weighted_partials_kernel,
                               tb=tb, n_images=n, needs_mask=needs_mask)

    parts = pl.pallas_call(
        kernel,
        out_shape=jax.ShapeDtypeStruct((grid_n, 8, 128), jnp.float32),
        grid=(grid_n,),
        in_specs=[img_spec, img_spec],
        out_specs=part_spec,
        compiler_params=pltpu.CompilerParams(
            dimension_semantics=("parallel",),   # independent per-block partials
            vmem_limit_bytes=vmem_limit,
        ),
    )(pred3, tgt3)

    sum_d2 = jnp.sum(parts[:, 0, 0])
    sum_gd2 = jnp.sum(parts[:, 1, 0])
    gmax = jnp.max(parts[:, 2, 0])

    count = jnp.float32(n * h * w)
    # loss = mean((1 + 0.5 * grad_mag / (gmax + 1e-6)) * diff^2)
    return (sum_d2 + (0.5 / (gmax + 1e-6)) * sum_gd2) / count


def _reference(pred, target):
    """Pure-JAX reference mirroring the PyTorch module, for verification."""
    n, c, h, w = pred.shape
    t = target.reshape(n, h, w).astype(jnp.float32)
    p = jnp.pad(t, ((0, 0), (1, 1), (1, 1)))

    def sh(di, dj):
        return p[:, di:di + h, dj:dj + w]

    gx = sh(0, 0) - sh(0, 2) + 2 * sh(1, 0) - 2 * sh(1, 2) + sh(2, 0) - sh(2, 2)
    gy = sh(0, 0) + 2 * sh(0, 1) + sh(0, 2) - sh(2, 0) - 2 * sh(2, 1) - sh(2, 2)
    gm = jnp.sqrt(gx * gx + gy * gy + 1e-6)
    wm = 1.0 + 0.5 * gm / (jnp.max(gm) + 1e-6)
    diff = pred.reshape(n, h, w).astype(jnp.float32) - t
    return jnp.mean(wm * diff * diff)


if __name__ == "__main__":
    key = jax.random.PRNGKey(0)
    k1, k2, k3, k4 = jax.random.split(key, 4)

    # NCHW, single channel (required by the Sobel conv in the reference module).
    pred = jax.random.normal(k1, (2, 1, 16, 16), dtype=jnp.float32)
    target = jax.random.normal(k2, (2, 1, 16, 16), dtype=jnp.float32)

    loss = weighted_mse_loss(pred, target)
    jax.block_until_ready(loss)
    ref = _reference(pred, target)
    assert jnp.allclose(loss, ref, rtol=1e-5, atol=1e-5), (loss, ref)

    # Odd batch size -> exercises the ragged-last-block masking path.
    pred3 = jax.random.normal(k3, (3, 1, 16, 16), dtype=jnp.float32)
    target3 = jax.random.normal(k4, (3, 1, 16, 16), dtype=jnp.float32)
    loss3 = weighted_mse_loss(pred3, target3)
    jax.block_until_ready(loss3)
    ref3 = _reference(pred3, target3)
    assert jnp.allclose(loss3, ref3, rtol=1e-5, atol=1e-5), (loss3, ref3)

    print("KERNEL_OK")
</pallas_src>

<mosaic_0001>
module attributes {stable_mosaic.version = 11 : i64} {
  func.func @_edge_weighted_partials_kernel(%arg0: i32, %arg1: memref<1x16x16xf32, #tpu.memory_space<vmem>>, %arg2: memref<1x16x16xf32, #tpu.memory_space<vmem>>, %arg3: memref<1x8x128xf32, #tpu.memory_space<vmem>>) attributes {dimension_semantics = [#tpu.dimension_semantics<parallel>], iteration_bounds = array<i64: 2>, scalar_prefetch = 0 : i64, scratch_operands = 0 : i64, tpu.core_type = #tpu.core_type<tc>, window_params = [{transform_indices = @transform_0, window_bounds = array<i64: 1, 16, 16>}, {transform_indices = @transform_1, window_bounds = array<i64: 1, 16, 16>}, {transform_indices = @transform_2, window_bounds = array<i64: 1, 8, 128>}]} {
    %c0 = arith.constant 0 : index
    %c0_0 = arith.constant 0 : index
    %c0_1 = arith.constant 0 : index
    %0 = vector.load %arg1[%c0, %c0_0, %c0_1] : memref<1x16x16xf32, #tpu.memory_space<vmem>>, vector<1x16x16xf32>
    %c0_2 = arith.constant 0 : index
    %c0_3 = arith.constant 0 : index
    %c0_4 = arith.constant 0 : index
    %1 = vector.load %arg2[%c0_2, %c0_3, %c0_4] : memref<1x16x16xf32, #tpu.memory_space<vmem>>, vector<1x16x16xf32>
    %2 = tpu.iota {dimensions = array<i32: 1>} : vector<1x16x16xi32>
    %3 = tpu.iota {dimensions = array<i32: 2>} : vector<1x16x16xi32>
    %c1_i32 = arith.constant 1 : i32
    %4 = vector.broadcast %c1_i32 : i32 to vector<1x16x16xi32>
    %5 = arith.cmpi sge, %3, %4 : vector<1x16x16xi32>
    %c15_i32 = arith.constant 15 : i32
    %6 = vector.broadcast %c15_i32 : i32 to vector<1x16x16xi32>
    %7 = arith.cmpi slt, %3, %6 : vector<1x16x16xi32>
    %c1_i32_5 = arith.constant 1 : i32
    %8 = vector.broadcast %c1_i32_5 : i32 to vector<1x16x16xi32>
    %9 = arith.cmpi sge, %2, %8 : vector<1x16x16xi32>
    %c15_i32_6 = arith.constant 15 : i32
    %10 = vector.broadcast %c15_i32_6 : i32 to vector<1x16x16xi32>
    %11 = arith.cmpi slt, %2, %10 : vector<1x16x16xi32>
    %c1_i32_7 = arith.constant 1 : i32
    %12 = tpu.dynamic_rotate %1 by %c1_i32_7 dim 2 : vector<1x16x16xf32>, i32 -> vector<1x16x16xf32>
    %cst = arith.constant 0.000000e+00 : f32
    %13 = vector.broadcast %cst : f32 to vector<1x16x16xf32>
    %14 = arith.select %5, %12, %13 : vector<1x16x16xi1>, vector<1x16x16xf32>
    %c15_i32_8 = arith.constant 15 : i32
    %15 = tpu.dynamic_rotate %1 by %c15_i32_8 dim 2 : vector<1x16x16xf32>, i32 -> vector<1x16x16xf32>
    %cst_9 = arith.constant 0.000000e+00 : f32
    %16 = vector.broadcast %cst_9 : f32 to vector<1x16x16xf32>
    %17 = arith.select %7, %15, %16 : vector<1x16x16xi1>, vector<1x16x16xf32>
    %18 = arith.subf %14, %17 : vector<1x16x16xf32>
    %cst_10 = arith.constant 2.000000e+00 : f32
    %19 = vector.broadcast %cst_10 : f32 to vector<1x16x16xf32>
    %20 = arith.mulf %19, %1 : vector<1x16x16xf32>
    %21 = arith.addf %14, %20 : vector<1x16x16xf32>
    %22 = arith.addf %21, %17 : vector<1x16x16xf32>
    %c1_i32_11 = arith.constant 1 : i32
    %23 = tpu.dynamic_rotate %18 by %c1_i32_11 dim 1 : vector<1x16x16xf32>, i32 -> vector<1x16x16xf32>
    %cst_12 = arith.constant 0.000000e+00 : f32
    %24 = vector.broadcast %cst_12 : f32 to vector<1x16x16xf32>
    %25 = arith.select %9, %23, %24 : vector<1x16x16xi1>, vector<1x16x16xf32>
    %cst_13 = arith.constant 2.000000e+00 : f32
    %26 = vector.broadcast %cst_13 : f32 to vector<1x16x16xf32>
    %27 = arith.mulf %26, %18 : vector<1x16x16xf32>
    %28 = arith.addf %25, %27 : vector<1x16x16xf32>
    %c15_i32_14 = arith.constant 15 : i32
    %29 = tpu.dynamic_rotate %18 by %c15_i32_14 dim 1 : vector<1x16x16xf32>, i32 -> vector<1x16x16xf32>
    %cst_15 = arith.constant 0.000000e+00 : f32
    %30 = vector.broadcast %cst_15 : f32 to vector<1x16x16xf32>
    %31 = arith.select %11, %29, %30 : vector<1x16x16xi1>, vector<1x16x16xf32>
    %32 = arith.addf %28, %31 : vector<1x16x16xf32>
    %c1_i32_16 = arith.constant 1 : i32
    %33 = tpu.dynamic_rotate %22 by %c1_i32_16 dim 1 : vector<1x16x16xf32>, i32 -> vector<1x16x16xf32>
    %cst_17 = arith.constant 0.000000e+00 : f32
    %34 = vector.broadcast %cst_17 : f32 to vector<1x16x16xf32>
    %35 = arith.select %9, %33, %34 : vector<1x16x16xi1>, vector<1x16x16xf32>
    %c15_i32_18 = arith.constant 15 : i32
    %36 = tpu.dynamic_rotate %22 by %c15_i32_18 dim 1 : vector<1x16x16xf32>, i32 -> vector<1x16x16xf32>
    %cst_19 = arith.constant 0.000000e+00 : f32
    %37 = vector.broadcast %cst_19 : f32 to vector<1x16x16xf32>
    %38 = arith.select %11, %36, %37 : vector<1x16x16xi1>, vector<1x16x16xf32>
    %39 = arith.subf %35, %38 : vector<1x16x16xf32>
    %40 = arith.mulf %32, %32 : vector<1x16x16xf32>
    %41 = arith.mulf %39, %39 : vector<1x16x16xf32>
    %42 = arith.addf %40, %41 : vector<1x16x16xf32>
    %cst_20 = arith.constant 9.99999997E-7 : f32
    %43 = vector.broadcast %cst_20 : f32 to vector<1x16x16xf32>
    %44 = arith.addf %42, %43 : vector<1x16x16xf32>
    %45 = math.sqrt %44 : vector<1x16x16xf32>
    %46 = arith.subf %0, %1 : vector<1x16x16xf32>
    %47 = arith.mulf %46, %46 : vector<1x16x16xf32>
    %48 = vector.shape_cast %47 : vector<1x16x16xf32> to vector<1x1x16x16xf32>
    %cst_21 = arith.constant dense<0.000000e+00> : vector<1xf32>
    %49 = vector.multi_reduction <add>, %48, %cst_21 [1, 2, 3] : vector<1x1x16x16xf32> to vector<1xf32>
    %50 = vector.shape_cast %49 : vector<1xf32> to vector<1x1x1x1xf32>
    %51 = vector.extract %50[0, 0, 0, 0] : f32 from vector<1x1x1x1xf32>
    %52 = arith.mulf %45, %47 : vector<1x16x16xf32>
    %53 = vector.shape_cast %52 : vector<1x16x16xf32> to vector<1x1x16x16xf32>
    %cst_22 = arith.constant dense<0.000000e+00> : vector<1xf32>
    %54 = vector.multi_reduction <add>, %53, %cst_22 [1, 2, 3] : vector<1x1x16x16xf32> to vector<1xf32>
    %55 = vector.shape_cast %54 : vector<1xf32> to vector<1x1x1x1xf32>
    %56 = vector.extract %55[0, 0, 0, 0] : f32 from vector<1x1x1x1xf32>
    %57 = vector.shape_cast %45 : vector<1x16x16xf32> to vector<1x1x16x16xf32>
    %cst_23 = arith.constant dense<0xFF800000> : vector<1xf32>
    %58 = vector.multi_reduction <maximumf>, %57, %cst_23 [1, 2, 3] : vector<1x1x16x16xf32> to vector<1xf32>
    %59 = vector.shape_cast %58 : vector<1xf32> to vector<1x1x1x1xf32>
    %60 = vector.extract %59[0, 0, 0, 0] : f32 from vector<1x1x1x1xf32>
    %61 = tpu.iota {dimensions = array<i32: 0>} : vector<8x128xi32>
    %c0_i32 = arith.constant 0 : i32
    %62 = vector.broadcast %c0_i32 : i32 to vector<8x128xi32>
    %63 = arith.cmpi eq, %61, %62 : vector<8x128xi32>
    %c1_i32_24 = arith.constant 1 : i32
    %64 = vector.broadcast %c1_i32_24 : i32 to vector<8x128xi32>
    %65 = arith.cmpi eq, %61, %64 : vector<8x128xi32>
    %66 = vector.broadcast %56 : f32 to vector<8x128xf32>
    %67 = vector.broadcast %60 : f32 to vector<8x128xf32>
    %68 = arith.select %65, %66, %67 : vector<8x128xi1>, vector<8x128xf32>
    %69 = vector.broadcast %51 : f32 to vector<8x128xf32>
    %70 = arith.select %63, %69, %68 : vector<8x128xi1>, vector<8x128xf32>
    %c0_25 = arith.constant 0 : index
    %c0_26 = arith.constant 0 : index
    %c0_27 = arith.constant 0 : index
    %71 = vector.load %arg3[%c0_25, %c0_26, %c0_27] : memref<1x8x128xf32, #tpu.memory_space<vmem>>, vector<1x8x128xf32>
    %72 = vector.shape_cast %71 : vector<1x8x128xf32> to vector<8x128xf32>
    %73 = vector.shape_cast %70 : vector<8x128xf32> to vector<1x8x128xf32>
    tpu.vector_store %arg3[%c0_25, %c0_26, %c0_27], %73 {strides = array<i32>} : memref<1x8x128xf32, #tpu.memory_space<vmem>>, vector<1x8x128xf32>,
    return
  }
  func.func @transform_0(%arg0: i32) -> (i32, i32, i32) {
    %c0_i32 = arith.constant 0 : i32
    %c0_i32_0 = arith.constant 0 : i32
    %c0_i32_1 = arith.constant 0 : i32
    return %arg0, %c0_i32, %c0_i32_0 : i32, i32, i32
  }
  func.func @transform_1(%arg0: i32) -> (i32, i32, i32) {
    %c0_i32 = arith.constant 0 : i32
    %c0_i32_0 = arith.constant 0 : i32
    %c0_i32_1 = arith.constant 0 : i32
    return %arg0, %c0_i32, %c0_i32_0 : i32, i32, i32
  }
  func.func @transform_2(%arg0: i32) -> (i32, i32, i32) {
    %c0_i32 = arith.constant 0 : i32
    %c0_i32_0 = arith.constant 0 : i32
    %c0_i32_1 = arith.constant 0 : i32
    return %arg0, %c0_i32, %c0_i32_0 : i32, i32, i32
  }
}

</mosaic_0001>

<llo_original>
// kernel: tpu_custom_call.1
$region0: #{tpu_custom_call.1}
  #allocation0 [shape = 'u32[]', space=smem, size = 0x4, offset = 0x4, fixed_abs, tag = 'smem constant byte address 0x4 - core index']
  #allocation1 [shape = 'u32[144,128]{1,0:T(1,128)}', space=vmem, size = 0x12000, scoped, tag = 'internal scratch']
  %s0 = inlined_call_operand.hbm [shape: f32[2,16,16], index: 0, kind: input, shape index: {}]
  %s1 = inlined_call_operand.hbm [shape: f32[2,16,16], index: 1, kind: input, shape index: {}]
  %s2 = inlined_call_operand.hbm [shape: f32[2,8,128], index: 2, kind: output, shape index: {}]
  %s3 = sld [smem:[#allocation0]]
  $region49: #{tpu_custom_call.1} parent=0
    _
  %s5 = ssub.s32 1, %s3
  %s6 = scalar_select 0, %s5, %s3
  $region1: #{tpu_custom_call.1} parent=0
    #allocation2 [shape = 'u8[16384]{0}', space=vmem, size = 0x4000, scoped, tag = 'input window, operand 0']
    #allocation3 [shape = 's32[2]{0}', space=sflag, size = 0x8, scoped, tag = 'scoped memory for tpu_custom_call.1']
    #allocation4 [shape = 's32[2]{0}', space=sflag, size = 0x8, scoped, tag = 'scoped memory for tpu_custom_call.1']
    #allocation5 [shape = 'u8[16384]{0}', space=vmem, size = 0x4000, scoped, tag = 'input window, operand 1']
    #allocation6 [shape = 's32[2]{0}', space=sflag, size = 0x8, scoped, tag = 'scoped memory for tpu_custom_call.1']
    #allocation7 [shape = 'u8[8192]{0}', space=vmem, size = 0x2000, scoped, tag = 'output window, operand 0']
    %7 = vsyncpa [#allocation3], 0
    %s8 = scalar_lea.sflag [#allocation3], 1
    %9 = vsyncpa %s8, 0
    %10 = vsyncpa [#allocation6], 0
    %s11 = scalar_lea.sflag [#allocation6], 1
    %12 = vsyncpa %s11, 0
    %13 = vsyncpa [#allocation4], 0
    %s14 = scalar_lea.sflag [#allocation4], 1
    %15 = vsyncpa %s14, 0
    loop: start=0, step=1, limit=4
    $region2: #{tpu_custom_call.1} parent=1 // loop_pre_header
      _
    $region3: #{tpu_custom_call.1} parent=1 // loop_header
      %s17 = sphi 0, %s21
      %p18 = scmp.ge.s32.totalorder %s17, 4
      %s27 = sphi 0, %s29
      %s30 = sphi 0, %s27
      %s31 = sphi 0, %s30
      %s47 = sphi 0, %s31
      %s53 = sphi 0, %s55
      %s56 = sphi 0, %s53
      %s57 = sphi 0, %s56
      %s73 = sphi 0, %s57
      %s79 = sphi 0, %s81
      %s82 = sphi 0, %s79
      %s83 = sphi 0, %s82
      %s99 = sphi 0, %s83
    $region4: #{tpu_custom_call.1} parent=1 // loop_header_branch
      %20 = sbr.rel (%p18) target = $region8
    $region5: #{tpu_custom_call.1} parent=1 // loop_body
      %s22 = ssub.s32 %s17, 1
      %s23 = ssub.s32 %s17, 2
      %s24 = sadd.s32 %s17, 1
      %s25 = ssub.s32 %s17, %s24
      %p26 = scmp.eq.s32.totalorder %s25, 0
      %s28 = sadd.s32 %s27, 1
      %s29 = scalar_select %p26, %s27, %s28
      %p32 = pneg %p26
      %p33 = scmp.eq.s32.totalorder %s17, 1
      %p34 = por %p32, %p33
      %p35 = scmp.ne.s32.totalorder %s27, %s30
      %p36 = scmp.eq.s32.totalorder %s17, 0
      %p37 = por %p35, %p36
      %p38 = scmp.ne.s32.totalorder %s27, %s30
      %p39 = scmp.eq.s32.totalorder %s22, 1
      %p40 = por %p38, %p39
      %p41 = scmp.ne.s32.totalorder %s30, %s31
      %p42 = scmp.eq.s32.totalorder %s22, 0
      %p43 = por %p41, %p42
      %p44 = scmp.ne.s32.totalorder %s30, %s31
      %p45 = scmp.eq.s32.totalorder %s23, 1
      %p46 = por %p44, %p45
      %p48 = scmp.ne.s32.totalorder %s31, %s47
      %p49 = scmp.eq.s32.totalorder %s23, 0
      %p50 = por %p48, %p49
      %s51 = ssub.s32 %s17, %s24
      %p52 = scmp.eq.s32.totalorder %s51, 0
      %s54 = sadd.s32 %s53, 1
      %s55 = scalar_select %p52, %s53, %s54
      %p58 = pneg %p52
      %p59 = scmp.eq.s32.totalorder %s17, 1
      %p60 = por %p58, %p59
      %p61 = scmp.ne.s32.totalorder %s53, %s56
      %p62 = scmp.eq.s32.totalorder %s17, 0
      %p63 = por %p61, %p62
      %p64 = scmp.ne.s32.totalorder %s53, %s56
      %p65 = scmp.eq.s32.totalorder %s22, 1
      %p66 = por %p64, %p65
      %p67 = scmp.ne.s32.totalorder %s56, %s57
      %p68 = scmp.eq.s32.totalorder %s22, 0
      %p69 = por %p67, %p68
      %p70 = scmp.ne.s32.totalorder %s56, %s57
      %p71 = scmp.eq.s32.totalorder %s23, 1
      %p72 = por %p70, %p71
      %p74 = scmp.ne.s32.totalorder %s57, %s73
      %p75 = scmp.eq.s32.totalorder %s23, 0
      %p76 = por %p74, %p75
      %s77 = ssub.s32 %s17, %s24
      %p78 = scmp.eq.s32.totalorder %s77, 0
      %s80 = sadd.s32 %s79, 1
      %s81 = scalar_select %p78, %s79, %s80
      %p84 = pneg %p78
      %p85 = scmp.eq.s32.totalorder %s17, 1
      %p86 = por %p84, %p85
      %p87 = scmp.ne.s32.totalorder %s79, %s82
      %p88 = scmp.eq.s32.totalorder %s17, 0
      %p89 = por %p87, %p88
      %p90 = scmp.ne.s32.totalorder %s79, %s82
      %p91 = scmp.eq.s32.totalorder %s22, 1
      %p92 = por %p90, %p91
      %p93 = scmp.ne.s32.totalorder %s82, %s83
      %p94 = scmp.eq.s32.totalorder %s22, 0
      %p95 = por %p93, %p94
      %p96 = scmp.ne.s32.totalorder %s82, %s83
      %p97 = scmp.eq.s32.totalorder %s23, 1
      %p98 = por %p96, %p97
      %p100 = scmp.ne.s32.totalorder %s83, %s99
      %p101 = scmp.eq.s32.totalorder %s23, 0
      %p102 = por %p100, %p101
      %p103 = scmp.le.s32.totalorder 1, %s17
      %p104 = scmp.lt.s32.totalorder %s17, 3
      %p105 = pnand %p103, %p104
      %p106 = pneg %p105
      // Predicated region
      $region9: #{tpu_custom_call.1} parent=5 // pred_check
        _
      $region10: #{tpu_custom_call.1} parent=5 // pred_check_branch
        %108 = sbr.rel (%p105) target = $region12
      $region11: #{tpu_custom_call.1} parent=5 // pred_region
        %s109 = ssub.s32 %s17, 1
      $region12: #{tpu_custom_call.1} parent=5 // pred_fallthru
        _
      %p110 = scmp.lt.s32.totalorder %s17, 2
      // Predicated region
      $region13: #{tpu_custom_call.1} parent=5 // pred_check
        %p111 = pneg %p110
      $region14: #{tpu_custom_call.1} parent=5 // pred_check_branch
        %113 = sbr.rel (%p111) target = $region16
      $region15: #{tpu_custom_call.1} parent=5 // pred_region
        // Predicated region
        $region17: #{tpu_custom_call.1} parent=15 // pred_check
          %p114 = pneg %p37
        $region18: #{tpu_custom_call.1} parent=15 // pred_check_branch
          %116 = sbr.rel (%p114) target = $region20
        $region19: #{tpu_custom_call.1} parent=15 // pred_region
          %s117 = sand.u32 %s27, 1
          %s118 = scalar_lea.sflag [#allocation3], %s117
          %s119 = sand.u32 %s27, 1
          %s120 = smul.addr %s119, 16
          %s121 = scalar_lea.vmem [#allocation2], %s120
          %s123 = ssub.s32 256, 256
          %124 = vsyncadd %s118, %s123
          %s125 = smul.addr %s17, 2
          %s126 = smul.addr %s125, 128
          %s127 = scalar_lea.hbm %s0, %s126
          %s128 = sshll.u32 %s121, 4
          %s129 = int_to_ptr.vmem [resolvable:$true] %s128
          %134 = dma.hbm_to_vmem [thread:$0]  %s127, 256, %s129, %s118, 128, 128, 8
        $region20: #{tpu_custom_call.1} parent=15 // pred_fallthru
          _
        // Predicated region
        $region21: #{tpu_custom_call.1} parent=15 // pred_check
          %p135 = pneg %p63
        $region22: #{tpu_custom_call.1} parent=15 // pred_check_branch
          %137 = sbr.rel (%p135) target = $region24
        $region23: #{tpu_custom_call.1} parent=15 // pred_region
          %s138 = sand.u32 %s53, 1
          %s139 = scalar_lea.sflag [#allocation6], %s138
          %s140 = sand.u32 %s53, 1
          %s141 = smul.addr %s140, 16
          %s142 = scalar_lea.vmem [#allocation5], %s141
          %s144 = ssub.s32 256, 256
          %145 = vsyncadd %s139, %s144
          %s146 = smul.addr %s17, 2
          %s147 = smul.addr %s146, 128
          %s148 = scalar_lea.hbm %s1, %s147
          %s149 = sshll.u32 %s142, 4
          %s150 = int_to_ptr.vmem [resolvable:$true] %s149
          %155 = dma.hbm_to_vmem [thread:$0]  %s148, 256, %s150, %s139, 128, 128, 8
        $region24: #{tpu_custom_call.1} parent=15 // pred_fallthru
          _
      $region16: #{tpu_custom_call.1} parent=5 // pred_fallthru
        _
      %p156 = scmp.le.s32.totalorder 1, %s17
      %p157 = scmp.lt.s32.totalorder %s17, 3
      %p158 = pnand %p156, %p157
      %p159 = pneg %p158
      // Predicated region
      $region25: #{tpu_custom_call.1} parent=5 // pred_check
        _
      $region26: #{tpu_custom_call.1} parent=5 // pred_check_branch
        %161 = sbr.rel (%p158) target = $region28
      $region27: #{tpu_custom_call.1} parent=5 // pred_region
        %s162 = ssub.s32 %s17, 1
        %s163 = sand.u32 %s30, 1
        %s164 = scalar_lea.sflag [#allocation3], %s163
        %s165 = sand.u32 %s30, 1
        %s166 = smul.addr %s165, 16
        %s167 = scalar_lea.vmem [#allocation2], %s166
        // Predicated region
        $region29: #{tpu_custom_call.1} parent=27 // pred_check
          %p168 = pneg %p43
        $region30: #{tpu_custom_call.1} parent=27 // pred_check_branch
          %170 = sbr.rel (%p168) target = $region32
        $region31: #{tpu_custom_call.1} parent=27 // pred_region
          %171 = dma.done %s164, 256
        $region32: #{tpu_custom_call.1} parent=27 // pred_fallthru
          _
        %s172 = sand.u32 %s56, 1
        %s173 = scalar_lea.sflag [#allocation6], %s172
        %s174 = sand.u32 %s56, 1
        %s175 = smul.addr %s174, 16
        %s176 = scalar_lea.vmem [#allocation5], %s175
        // Predicated region
        $region33: #{tpu_custom_call.1} parent=27 // pred_check
          %p177 = pneg %p69
        $region34: #{tpu_custom_call.1} parent=27 // pred_check_branch
          %179 = sbr.rel (%p177) target = $region36
        $region35: #{tpu_custom_call.1} parent=27 // pred_region
          %180 = dma.done %s173, 256
        $region36: #{tpu_custom_call.1} parent=27 // pred_fallthru
          _
        %s181 = sand.u32 %s30, 1
        %s182 = scalar_lea.sflag [#allocation3], %s181
        %s183 = sand.u32 %s30, 1
        %s184 = smul.addr %s183, 16
        %s185 = scalar_lea.vmem [#allocation2], %s184
        %p186 = pneg %p43
        %p187 = pneg %p40
        %s188 = sand.u32 %s56, 1
        %s189 = scalar_lea.sflag [#allocation6], %s188
        %s190 = sand.u32 %s56, 1
        %s191 = smul.addr %s190, 16
        %s192 = scalar_lea.vmem [#allocation5], %s191
        %p193 = pneg %p69
        %p194 = pneg %p66
        %p195 = pneg %p95
        %p196 = pneg %p92
        %s197 = sand.u32 %s82, 1
        %s198 = scalar_lea.sflag [#allocation4], %s197
        %s199 = sand.u32 %s82, 1
        %s200 = smul.addr %s199, 8
        %s201 = scalar_lea.vmem [#allocation7], %s200
        %v202 = vld [vmem:[%s167] sm:$0xff]
        %v203 = vld [vmem:[%s167 + $0x8] sm:$0xff]
        %v204 = vld [vmem:[%s176] sm:$0xff]
        %v205 = vld [vmem:[%s176 + $0x8] sm:$0xff]
        %v206 = vlaneseq
        %v207 = vshrl.u32 %v206, 7
        %v208 = vadd.s32 %v207, 8
        %v209 = vlaneseq
        %v210 = vand.u32 %v209, 127
        %vm211 = vcmp.ge.s32.totalorder %v210, 1
        %vm212 = vcmp.lt.s32.totalorder %v210, 15
        %vm213 = vcmp.ge.s32.totalorder %v207, 1
        %vm214 = vcmp.ge.s32.totalorder %v208, 1
        %vm215 = vcmp.lt.s32.totalorder %v207, 15
        %vm216 = vcmp.lt.s32.totalorder %v208, 15
        %vm217 = vcmask 1047680
        %218 = vrot.lane.b32.xlu0 %v204, 16
        %v219 = vpop.permute.xlu0 %218
        %v220 = vsel %vm217, %v219, %v204
        %221 = vrot.lane.b32.xlu0 %v205, 16
        %v222 = vpop.permute.xlu0 %221
        %v223 = vsel %vm217, %v222, %v205
        %224 = vrot.lane.b32.xlu0 %v220, 16
        %v225 = vpop.permute.xlu0 %224
        %226 = vrot.lane.b32.xlu0 %v223, 16
        %v227 = vpop.permute.xlu0 %226
        %v228 = vsel %vm217, %v225, %v204
        %v229 = vsel %vm217, %v227, %v205
        %232 = vrot.lane.b32.xlu0 %v228, 113
        %v233 = vpop.permute.xlu0 %232
        %234 = vrot.lane.b32.xlu0 %v229, 113
        %v235 = vpop.permute.xlu0 %234
        %v238 = vsel %vm211, %v233, 0.0
        %v239 = vsel %vm211, %v235, 0.0
        %240 = vrot.lane.b32.xlu0 %v228, 127
        %v241 = vpop.permute.xlu0 %240
        %242 = vrot.lane.b32.xlu0 %v229, 127
        %v243 = vpop.permute.xlu0 %242
        %v246 = vsel %vm212, %v241, 0.0
        %v247 = vsel %vm212, %v243, 0.0
        %v248 = vsub.f32 %v238, %v246
        %v249 = vsub.f32 %v239, %v247
        %v250 = vmul.f32 %v204, 2.0
        %v251 = vmul.f32 %v205, 2.0
        %v252 = vadd.f32 %v238, %v250
        %v253 = vadd.f32 %v239, %v251
        %v254 = vadd.f32 %v252, %v246
        %v255 = vadd.f32 %v253, %v247
        %v256 = vrot.slane %v248, 7
        %v257 = vrot.slane %v249, 7
        %vm258 = vcmp.lt.s32.totalorder %v207, 1
        %v259 = vsel %vm258, %v256, %v257
        %v260 = vsel %vm258, %v257, %v256
        %v261 = vsel %vm213, %v260, 0.0
        %v262 = vsel %vm214, %v259, 0.0
        %v263 = vmul.f32 %v248, 2.0
        %v264 = vmul.f32 %v249, 2.0
        %v265 = vadd.f32 %v261, %v263
        %v266 = vadd.f32 %v262, %v264
        %v267 = vrot.slane %v248, 1
        %v268 = vrot.slane %v249, 1
        %vm269 = vcmp.lt.s32.totalorder %v207, 7
        %v270 = vsel %vm269, %v267, %v268
        %v271 = vsel %vm269, %v268, %v267
        %v272 = vsel %vm215, %v270, 0.0
        %v273 = vsel %vm216, %v271, 0.0
        %v274 = vadd.f32 %v265, %v272
        %v275 = vadd.f32 %v266, %v273
        %v276 = vrot.slane %v254, 7
        %v277 = vrot.slane %v255, 7
        %v278 = vsel %vm258, %v276, %v277
        %v279 = vsel %vm258, %v277, %v276
        %v280 = vsel %vm213, %v279, 0.0
        %v281 = vsel %vm214, %v278, 0.0
        %v282 = vrot.slane %v254, 1
        %v283 = vrot.slane %v255, 1
        %v284 = vsel %vm269, %v282, %v283
        %v285 = vsel %vm269, %v283, %v282
        %v286 = vsel %vm215, %v284, 0.0
        %v287 = vsel %vm216, %v285, 0.0
        %v288 = vsub.f32 %v280, %v286
        %v289 = vsub.f32 %v281, %v287
        %v290 = vmul.f32 %v274, %v274
        %v291 = vmul.f32 %v275, %v275
        %v292 = vmul.f32 %v288, %v288
        %v293 = vmul.f32 %v289, %v289
        %v294 = vadd.f32 %v290, %v292
        %v295 = vadd.f32 %v291, %v293
        %v296 = vadd.f32 %v294, 1e-06
        %v297 = vadd.f32 %v295, 1e-06
        %v298 = vrsqrt.pop %v296
        %v299 = vmul.f32 %v296, %v298
        %vm300 = vcmp.eq.f32.partialorder %v296, inf
        %v301 = vsel %vm300, %v296, %v299
        %vm302 = vcmp.eq.f32.partialorder %v296, 0.0
        %v303 = vand.u32 %v296, 2147483648
        %v304 = vsel %vm302, %v303, %v301
        %v305 = vrsqrt.pop %v297
        %v306 = vmul.f32 %v297, %v305
        %vm307 = vcmp.eq.f32.partialorder %v297, inf
        %v308 = vsel %vm307, %v297, %v306
        %vm309 = vcmp.eq.f32.partialorder %v297, 0.0
        %v310 = vand.u32 %v297, 2147483648
        %v311 = vsel %vm309, %v310, %v308
        %v312 = vsub.f32 %v202, %v204
        %v313 = vsub.f32 %v203, %v205
        %v314 = vmul.f32 %v312, %v312
        %v315 = vmul.f32 %v313, %v313
        %vm316 = vcmask 130048
        %v317 = vsel %vm316, %v314, 0.0
        %v318 = vsel %vm316, %v315, 0.0
        %v319 = vadd.f32 %v317, %v318
        %320 = vadd.xlane.f32.xlu0 %v319
        %v321 = vpop.xlane.xlu0 %320
        %v322 = vrot.slane %v321, 4
        %v323 = vadd.f32 %v321, %v322
        %v324 = vrot.slane %v323, 2
        %v325 = vadd.f32 %v323, %v324
        %v326 = vrot.slane %v325, 1
        %v327 = vadd.f32 %v325, %v326
        %s328 = vtos %v327
        %v329 = vmul.f32 %v304, %v314
        %v330 = vmul.f32 %v311, %v315
        %v331 = vsel %vm316, %v329, 0.0
        %v332 = vsel %vm316, %v330, 0.0
        %v333 = vadd.f32 %v331, %v332
        %334 = vadd.xlane.f32.xlu0 %v333
        %v335 = vpop.xlane.xlu0 %334
        %v336 = vrot.slane %v335, 4
        %v337 = vadd.f32 %v335, %v336
        %v338 = vrot.slane %v337, 2
        %v339 = vadd.f32 %v337, %v338
        %v340 = vrot.slane %v339, 1
        %v341 = vadd.f32 %v339, %v340
        %s342 = vtos %v341
        %v343 = vsel %vm316, %v304, -inf
        %v344 = vsel %vm316, %v311, -inf
        %v345 = vmax.f32 %v343, %v344
        %346 = vmax.xlane.f32.xlu0 %v345
        %v347 = vpop.xlane.xlu0 %346
        %v348 = vrot.slane %v347, 4
        %v349 = vmax.f32 %v347, %v348
        %v350 = vrot.slane %v349, 2
        %v351 = vmax.f32 %v349, %v350
        %v352 = vrot.slane %v351, 1
        %v353 = vmax.f32 %v351, %v352
        %s354 = vtos %v353
        %vm355 = vcmp.eq.s32.totalorder %v207, 0
        %vm356 = vcmp.eq.s32.totalorder %v207, 1
        %v357 = vstv %s342
        %v358 = vstv %s354
        %v359 = vsel %vm356, %v357, %v358
        %v360 = vstv %s328
        %v361 = vsel %vm355, %v360, %v359
        %362 = vst [vmem:[%s201] sm:$0xff] %v361
        %s363 = sand.u32 %s82, 1
        %s364 = scalar_lea.sflag [#allocation4], %s363
        %s365 = sand.u32 %s82, 1
        %s366 = smul.addr %s365, 8
        %s367 = scalar_lea.vmem [#allocation7], %s366
        // Predicated region
        $region37: #{tpu_custom_call.1} parent=27 // pred_check
          %p368 = pneg %p92
        $region38: #{tpu_custom_call.1} parent=27 // pred_check_branch
          %370 = sbr.rel (%p368) target = $region40
        $region39: #{tpu_custom_call.1} parent=27 // pred_region
          %s372 = ssub.s32 128, 128
          %373 = vsyncadd %s364, %s372
          %s374 = smul.addr %s22, 128
          %s375 = scalar_lea.hbm %s2, %s374
          %s377 = sshll.u32 %s367, 4
          %s378 = int_to_ptr.vmem [resolvable:$true] %s377
          %380 = dma.vmem_to_hbm [thread:$0]  %s378, 128, %s375, %s364
        $region40: #{tpu_custom_call.1} parent=27 // pred_fallthru
          _
      $region28: #{tpu_custom_call.1} parent=5 // pred_fallthru
        _
      %p381 = scmp.le.s32.totalorder 2, %s17
      // Predicated region
      $region41: #{tpu_custom_call.1} parent=5 // pred_check
        %p382 = pneg %p381
      $region42: #{tpu_custom_call.1} parent=5 // pred_check_branch
        %384 = sbr.rel (%p382) target = $region44
      $region43: #{tpu_custom_call.1} parent=5 // pred_region
        %s385 = ssub.s32 %s17, 2
        // Predicated region
        $region45: #{tpu_custom_call.1} parent=43 // pred_check
          %p386 = pneg %p98
        $region46: #{tpu_custom_call.1} parent=43 // pred_check_branch
          %388 = sbr.rel (%p386) target = $region48
        $region47: #{tpu_custom_call.1} parent=43 // pred_region
          %s389 = sand.u32 %s83, 1
          %s390 = scalar_lea.sflag [#allocation4], %s389
          %s391 = sand.u32 %s83, 1
          %s392 = smul.addr %s391, 8
          %s393 = scalar_lea.vmem [#allocation7], %s392
          %394 = dma.done %s390, 128
        $region48: #{tpu_custom_call.1} parent=43 // pred_fallthru
          _
      $region44: #{tpu_custom_call.1} parent=5 // pred_fallthru
        _
    $region6: #{tpu_custom_call.1} parent=1 // loop_footer
      %s21 = sadd.s32 1, %s17
    $region7: #{tpu_custom_call.1} parent=1 // loop_footer_branch
      %16 = sbr.rel target = $region3
    $region8: #{tpu_custom_call.1} parent=1 // loop_exit
      _
    %395 = vsyncpa [#allocation3], 1
    %s396 = scalar_lea.sflag [#allocation3], 1
    %397 = vsyncpa %s396, 1
    %398 = vsyncpa [#allocation6], 1
    %s399 = scalar_lea.sflag [#allocation6], 1
    %400 = vsyncpa %s399, 1
    %401 = vsyncpa [#allocation4], 1
    %s402 = scalar_lea.sflag [#allocation4], 1
    %403 = vsyncpa %s402, 1

</llo_original>
